<compile_context>
chip_gen: v5e
topology: v5e:2x2
jax: 0.10.0
libtpu: 0.0.40
codegen_flags: <defaults>
</compile_context>

<pallas_src>
import functools
import math

import jax
import jax.numpy as jnp
from jax import lax
from jax.experimental import pallas as pl
from jax.experimental.pallas import tpu as pltpu

LARGE_NUMBER = 1000000000.0


def _pick_tile(n, target):
    """Largest tile t <= target with t | n and (t % 8 == 0 or t == n)."""
    if n <= target:
        return n
    for t in range(target, 0, -1):
        if n % t == 0 and t % 8 == 0:
            return t
    return n  # fall back to a single full-size block


def _normalize_kernel(z_ref, zn_ref, *, tau):
    """F.normalize(z, p=2, dim=1) / sqrt(tau), cast to bf16."""
    x = z_ref[...].astype(jnp.float32)
    norm = jnp.sqrt(jnp.sum(x * x, axis=1, keepdims=True))
    scale = (1.0 / math.sqrt(tau)) / jnp.maximum(norm, 1e-12)
    zn_ref[...] = (x * scale).astype(jnp.bfloat16)


def _ntxent_tile_kernel(zr_ref, zc_ref, *rest, tau, multiplier):
    """One (row-tile i, col-tile j) step of the online NTXent reduction.

    rest = (pos_ref_0 .. pos_ref_{m-2}, out_ref, sum_exp_scratch)
    """
    m = multiplier
    pos_refs = rest[:m - 1]
    out_ref = rest[m - 1]
    sum_exp_ref = rest[m]

    j = pl.program_id(1)
    nj = pl.num_programs(1)
    c = 1.0 / float(tau)  # constant LSE shift: |logit| <= 1/tau post-normalize

    @pl.when(j == 0)
    def _():
        sum_exp_ref[...] = jnp.zeros_like(sum_exp_ref)

    zr = zr_ref[...]                      # (TM, Dp) bf16, resident across j
    zc = zc_ref[...]                      # (TN, Dp) bf16, streamed over j
    # logits block on the MXU, f32 accumulation, contraction on the feature dim
    logits = lax.dot_general(zr, zc, (((1,), (1,)), ((), ())),
                             preferred_element_type=jnp.float32)
    sum_exp_ref[...] += jnp.sum(jnp.exp(logits - c), axis=1, keepdims=True)

    @pl.when(j == nj - 1)
    def _():
        zr32 = zr.astype(jnp.float32)
        # Exact removal of the self-similarity (diagonal) contribution.
        self_logit = jnp.sum(zr32 * zr32, axis=1, keepdims=True)   # ~= 1/tau
        s_off = sum_exp_ref[...] - jnp.exp(self_logit - c)
        lse = c + jnp.log(s_off)                                   # (TM, 1)
        # Positive-pair logits: direct row dots against the positive row tiles.
        pos = jnp.zeros_like(lse)
        for k in range(m - 1):
            pk = pos_refs[k][...].astype(jnp.float32)              # (TM, Dp)
            pos = pos + jnp.sum(zr32 * pk, axis=1, keepdims=True)
        # Per-row partial loss: (m-1)*lse_i - sum_k logit(i, positive_k)
        out_ref[...] = jnp.float32(m - 1) * lse - pos


def ntxent_loss(z, tau=1.0, multiplier=2, *, block_rows=512, block_cols=512):
    """Pallas implementation of NTXent.forward (non-distributed).

    Returns (loss, 0) like the PyTorch module.
    """
    n, d = z.shape
    m = multiplier
    assert m >= 2 and n % m == 0

    # Lane-align the feature dim (zero-padding is norm / dot-product neutral).
    dp = ((d + 127) // 128) * 128
    z = z.astype(jnp.float32)
    if dp != d:
        z = jnp.pad(z, ((0, 0), (0, dp - d)))

    tm = _pick_tile(n, block_rows)
    tn = _pick_tile(n, block_cols)
    tr = _pick_tile(n, 512)
    ni, nj = n // tm, n // tn
    vmem_limit = 32 * 1024 * 1024  # explicit; safe on v5e/v6e/v7x

    # --- Prologue: normalize + 1/sqrt(tau) + bf16 cast, one pass over rows ---
    zn = pl.pallas_call(
        functools.partial(_normalize_kernel, tau=tau),
        out_shape=jax.ShapeDtypeStruct((n, dp), jnp.bfloat16),
        grid_spec=pltpu.PrefetchScalarGridSpec(
            num_scalar_prefetch=0,
            grid=(n // tr,),
            in_specs=[pl.BlockSpec((tr, dp), lambda r: (r, 0))],
            out_specs=pl.BlockSpec((tr, dp), lambda r: (r, 0))),
        compiler_params=pltpu.CompilerParams(
            dimension_semantics=("parallel",),
            vmem_limit_bytes=vmem_limit),
    )(z)

    # Positive rows for row i are rows (i + k*n/m) % n, k = 1..m-1.
    shifts = [(k * n) // m for k in range(1, m)]

    if (n // m) % tm == 0:
        # Shift is a whole number of row tiles: fetch positives directly from
        # zn via a shifted block index_map -> no rolled HBM copies at all.
        pos_specs = [
            pl.BlockSpec((tm, dp), lambda i, j, off=s // tm: ((i + off) % ni, 0))
            for s in shifts
        ]
        pos_args = [zn] * (m - 1)
    else:
        # Fallback: materialize rolled copies so every row's positive lands at
        # the same intra-tile offset (layout plumbing only; dots are in-kernel).
        pos_specs = [pl.BlockSpec((tm, dp), lambda i, j: (i, 0)) for _ in shifts]
        pos_args = [jnp.roll(zn, -s, axis=0) for s in shifts]

    # --- Main: tiled logits + online sum-of-exp + positive row dots ---
    partials = pl.pallas_call(
        functools.partial(_ntxent_tile_kernel, tau=tau, multiplier=m),
        out_shape=jax.ShapeDtypeStruct((n, 1), jnp.float32),
        grid_spec=pltpu.PrefetchScalarGridSpec(
            num_scalar_prefetch=0,
            grid=(ni, nj),
            in_specs=[
                pl.BlockSpec((tm, dp), lambda i, j: (i, 0)),   # row tile
                pl.BlockSpec((tn, dp), lambda i, j: (j, 0)),   # col tile
            ] + pos_specs,                                     # positive tiles
            out_specs=pl.BlockSpec((tm, 1), lambda i, j: (i, 0)),
            scratch_shapes=[pltpu.VMEM((tm, 1), jnp.float32)]),
        compiler_params=pltpu.CompilerParams(
            dimension_semantics=("parallel", "arbitrary"),
            vmem_limit_bytes=vmem_limit),
    )(zn, zn, *pos_args)

    norm = 1.0  # distributed normalization path intentionally not handled
    loss = jnp.sum(partials) / (n * (m - 1) * norm)
    return loss, 0


def _ntxent_ref(z, tau=1.0, multiplier=2):
    """Pure-JAX f32 reference matching the PyTorch module."""
    n = z.shape[0]
    m = multiplier
    zn = z / jnp.maximum(jnp.linalg.norm(z, axis=1, keepdims=True), 1e-12)
    zn = zn / jnp.sqrt(tau)
    logits = zn @ zn.T
    logits = logits.at[jnp.arange(n), jnp.arange(n)].set(-LARGE_NUMBER)
    logprob = jax.nn.log_softmax(logits, axis=1)
    labels = (jnp.repeat(jnp.arange(n), m)
              + jnp.tile(jnp.arange(m) * n // m, n)) % n
    labels = labels.reshape(n, m)[:, 1:].reshape(-1)
    rows = jnp.repeat(jnp.arange(n), m - 1)
    return -logprob[rows, labels].sum() / n / (m - 1)


if __name__ == "__main__":
    k1, k2 = jax.random.split(jax.random.PRNGKey(0))

    # Small shape consistent with the module (batch=8 embeddings, hidden=32).
    # Exercises the rolled-copies fallback path (n/m not a multiple of tm).
    N, D = 8, 32
    z = jax.random.normal(k1, (N, D), dtype=jnp.float32)
    loss, _ = ntxent_loss(z, tau=1.0, multiplier=2)
    loss = jax.block_until_ready(loss)
    ref = jax.block_until_ready(_ntxent_ref(z, tau=1.0, multiplier=2))
    assert jnp.allclose(loss, ref, rtol=2e-2, atol=2e-2), (loss, ref)

    # Second case: multi-tile grid, multiplier > 2, block-shifted positives.
    N2, D2 = 64, 48
    z2 = jax.random.normal(k2, (N2, D2), dtype=jnp.float32)
    loss2, _ = ntxent_loss(z2, tau=0.5, multiplier=4,
                           block_rows=16, block_cols=32)
    loss2 = jax.block_until_ready(loss2)
    ref2 = jax.block_until_ready(_ntxent_ref(z2, tau=0.5, multiplier=4))
    assert jnp.allclose(loss2, ref2, rtol=2e-2, atol=2e-2), (loss2, ref2)

    print("KERNEL_OK")
</pallas_src>

<mosaic_0001>
module attributes {stable_mosaic.version = 11 : i64} {
  func.func @_normalize_kernel(%arg0: i32, %arg1: memref<8x128xf32, #tpu.memory_space<vmem>>, %arg2: memref<8x128xbf16, #tpu.memory_space<vmem>>) attributes {dimension_semantics = [#tpu.dimension_semantics<parallel>], iteration_bounds = array<i64: 1>, scalar_prefetch = 0 : i64, scratch_operands = 0 : i64, tpu.core_type = #tpu.core_type<tc>, window_params = [{transform_indices = @transform_0, window_bounds = array<i64: 8, 128>}, {transform_indices = @transform_1, window_bounds = array<i64: 8, 128>}]} {
    %c0 = arith.constant 0 : index
    %c0_0 = arith.constant 0 : index
    %0 = vector.load %arg1[%c0, %c0_0] : memref<8x128xf32, #tpu.memory_space<vmem>>, vector<8x128xf32>
    %1 = arith.mulf %0, %0 : vector<8x128xf32>
    %cst = arith.constant dense<0.000000e+00> : vector<8xf32>
    %2 = vector.multi_reduction <add>, %1, %cst [1] : vector<8x128xf32> to vector<8xf32>
    %3 = vector.shape_cast %2 : vector<8xf32> to vector<8x1xf32>
    %4 = math.sqrt %3 : vector<8x1xf32>
    %cst_1 = arith.constant 9.99999996E-13 : f32
    %5 = vector.broadcast %cst_1 : f32 to vector<8x1xf32>
    %6 = arith.maximumf %4, %5 : vector<8x1xf32>
    %cst_2 = arith.constant 1.000000e+00 : f32
    %7 = vector.broadcast %cst_2 : f32 to vector<8x1xf32>
    %8 = arith.divf %7, %6 : vector<8x1xf32>
    %9 = vector.broadcast %8 : vector<8x1xf32> to vector<8x128xf32>
    %10 = arith.mulf %0, %9 : vector<8x128xf32>
    %11 = arith.truncf %10 : vector<8x128xf32> to vector<8x128xbf16>
    %c0_3 = arith.constant 0 : index
    %c0_4 = arith.constant 0 : index
    %12 = vector.load %arg2[%c0_3, %c0_4] : memref<8x128xbf16, #tpu.memory_space<vmem>>, vector<8x128xbf16>
    tpu.vector_store %arg2[%c0_3, %c0_4], %11 {strides = array<i32>} : memref<8x128xbf16, #tpu.memory_space<vmem>>, vector<8x128xbf16>,
    return
  }
  func.func @transform_0(%arg0: i32) -> (i32, i32) {
    %c0_i32 = arith.constant 0 : i32
    %c0_i32_0 = arith.constant 0 : i32
    return %arg0, %c0_i32 : i32, i32
  }
  func.func @transform_1(%arg0: i32) -> (i32, i32) {
    %c0_i32 = arith.constant 0 : i32
    %c0_i32_0 = arith.constant 0 : i32
    return %arg0, %c0_i32 : i32, i32
  }
}

</mosaic_0001>

<llo_original>
// kernel: tpu_custom_call.1
$region0: #{tpu_custom_call.1}
  #allocation0 [shape = 'u32[]', space=smem, size = 0x4, offset = 0x4, fixed_abs, tag = 'smem constant byte address 0x4 - core index']
  #allocation1 [shape = 'u32[72,128]{1,0:T(1,128)}', space=vmem, size = 0x9000, scoped, tag = 'internal scratch']
  %s0 = inlined_call_operand.hbm [shape: f32[8,128], index: 0, kind: input, shape index: {}]
  %s1 = inlined_call_operand.hbm [shape: bf16[8,128], index: 1, kind: output, shape index: {}]
  %s2 = sld [smem:[#allocation0]]
  $region18: #{tpu_custom_call.1} parent=0
    _
  %s4 = ssub.s32 1, %s2
  %s5 = scalar_select 0, %s4, %s2
  $region1: #{tpu_custom_call.1} parent=0
    #allocation2 [shape = 'u8[4096]{0}', space=vmem, size = 0x1000, scoped, tag = 'input window, operand 0, single buffered']
    #allocation3 [shape = 's32[1]{0}', space=sflag, size = 0x4, scoped, tag = 'scoped memory for tpu_custom_call.1']
    #allocation4 [shape = 's32[1]{0}', space=sflag, size = 0x4, scoped, tag = 'scoped memory for tpu_custom_call.1']
    #allocation5 [shape = 'u8[2048]{0}', space=vmem, size = 0x800, scoped, tag = 'output window, operand 0, single buffered']
    %6 = vsyncpa [#allocation3], 0
    %7 = vsyncpa [#allocation4], 0
    // Predicated region
    $region2: #{tpu_custom_call.1} parent=1 // pred_check
      _
    $region3: #{tpu_custom_call.1} parent=1 // pred_check_branch
      %9 = sbr.rel (0) target = $region5
    $region4: #{tpu_custom_call.1} parent=1 // pred_region
      %11 = vsyncadd [#allocation3], 0
      %s13 = sshll.u32 %s0, 4
      %s14 = int_to_ptr.hbm [resolvable:$true] %s13
      %s15 = sshll.u32 [#allocation2], 4
      %s16 = int_to_ptr.vmem [resolvable:$true] %s15
      %18 = dma.hbm_to_vmem [thread:$0]  %s14, 128, %s16, [#allocation3]
    $region5: #{tpu_custom_call.1} parent=1 // pred_fallthru
      _
    // Predicated region
    $region6: #{tpu_custom_call.1} parent=1 // pred_check
      _
    $region7: #{tpu_custom_call.1} parent=1 // pred_check_branch
      %20 = sbr.rel (0) target = $region9
    $region8: #{tpu_custom_call.1} parent=1 // pred_region
      %22 = dma.done [#allocation3], 128
    $region9: #{tpu_custom_call.1} parent=1 // pred_fallthru
      _
    %v23 = vld [vmem:[#allocation2] sm:$0xff]
    %v24 = vmul.f32 %v23, %v23
    %25 = vadd.xlane.f32.xlu0 %v24
    %v26 = vpop.xlane.xlu0 %25
    %v27 = vrsqrt.pop %v26
    %v28 = vmul.f32 %v27, %v26
    %v29 = vmul.f32 %v28, %v27
    %v30 = vmul.f32 0.5, %v29
    %v31 = vsub.f32 1.5, %v30
    %v32 = vmul.f32 %v27, %v31
    %v33 = vmul.f32 %v26, %v32
    %vm34 = vcmp.eq.f32.partialorder %v26, inf
    %v35 = vsel %vm34, %v26, %v33
    %vm36 = vcmp.eq.f32.partialorder %v26, 0.0
    %v37 = vand.u32 %v26, 2147483648
    %v38 = vsel %vm36, %v37, %v35
    %v39 = vmax.f32 %v38, 1e-12
    %v40 = vrcp.pop %v39
    %v41 = vmul.f32 %v39, %v40
    %v42 = vsub.f32 1.0, %v41
    %v43 = vmul.f32 %v40, %v42
    %v44 = vadd.f32 %v40, %v43
    %vm45 = vweird.f32 %v39
    %vm46 = vweird.f32 %v40
    %vm47 = vmor %vm45, %vm46
    %v48 = vsel %vm47, %v40, %v44
    %v49 = vand.u32 2147483647, %v39
    %vm50 = vcmp.eq.f32.partialorder %v49, 8.507059e+37
    %v51 = vand.u32 %v39, 2147483648
    %v52 = vor.u32 1.1754944e-38, %v51
    %v53 = vsel %vm50, %v52, %v48
    %v54 = vmul.f32 1.0, %v53
    %v55 = vmul.f32 %v23, %v54
    %v56 = vpack.c.bf16 %v55, %v55
    %57 = vst [vmem:[#allocation5] sm:$0xf] %v56
    // Predicated region
    $region10: #{tpu_custom_call.1} parent=1 // pred_check
      _
    $region11: #{tpu_custom_call.1} parent=1 // pred_check_branch
      %59 = sbr.rel (0) target = $region13
    $region12: #{tpu_custom_call.1} parent=1 // pred_region
      %61 = vsyncadd [#allocation4], 0
      %s63 = sshll.u32 [#allocation5], 4
      %s64 = int_to_ptr.vmem [resolvable:$true] %s63
      %s65 = sshll.u32 %s1, 4
      %s66 = int_to_ptr.hbm [resolvable:$true] %s65
      %68 = dma.vmem_to_hbm [thread:$0]  %s64, 64, %s66, [#allocation4]
    $region13: #{tpu_custom_call.1} parent=1 // pred_fallthru
      _
    // Predicated region
    $region14: #{tpu_custom_call.1} parent=1 // pred_check
      _
    $region15: #{tpu_custom_call.1} parent=1 // pred_check_branch
      %70 = sbr.rel (0) target = $region17
    $region16: #{tpu_custom_call.1} parent=1 // pred_region
      %72 = dma.done [#allocation4], 64
    $region17: #{tpu_custom_call.1} parent=1 // pred_fallthru
      _
    %73 = vsyncpa [#allocation3], 1
    %74 = vsyncpa [#allocation4], 1

</llo_original>
